<compile_context>
chip_gen: v5e
topology: v5e:2x2
jax: 0.10.0
libtpu: 0.0.40
codegen_flags: <defaults>
</compile_context>

<pallas_src>
import jax
import jax.numpy as jnp
from jax.experimental import pallas as pl
from jax.experimental.pallas import tpu as pltpu

MAX_TILE_M = 16384     # upper bound on batch tile rows (multiple of 8)
TARGET_SPLITS = 4      # aim for >= 4 grid steps so v7x's 2 TCs both get work


# ----------------------------------------------------------------------------
# Fused graph kernel: fc1(relu) -> fc2(relu) -> add -> fc3
# ----------------------------------------------------------------------------
def _fused_graph_kernel(x_ref, w1_ref, b1_ref, w2_ref, b2_ref, w3_ref, b3_ref,
                        o_ref):
    # fc1: relu(x @ W1 + b1)         (intermediates live entirely in vregs)
    a1 = jnp.dot(x_ref[...], w1_ref[...], preferred_element_type=jnp.float32)
    a1 = jnp.maximum(a1 + b1_ref[...], 0.0)
    # fc2: relu(a1 @ W2 + b2)
    a2 = jnp.dot(a1, w2_ref[...], preferred_element_type=jnp.float32)
    a2 = jnp.maximum(a2 + b2_ref[...], 0.0)
    # res: Add(fc1, fc2) -- fused VPU add, free filler next to the matmuls
    res = a1 + a2
    # fc3 (no activation): the only HBM store of the kernel, written at the
    # true 16-lane width (masked vst, but 8x fewer bytes than a padded store).
    y = jnp.dot(res, w3_ref[...], preferred_element_type=jnp.float32)
    o_ref[...] = (y + b3_ref[...]).astype(o_ref.dtype)


def _choose_tile_m(M, n_in, n_out, dtype_bytes=4):
    """Batch tile: big enough to amortize step overhead, >=TARGET_SPLITS steps
    at large M for megacore/pipelining, VMEM-capacity aware per generation."""
    max_tile = MAX_TILE_M
    try:
        vmem = pltpu.get_tpu_info().vmem_capacity_bytes
        per_row = 2 * (n_in + n_out) * dtype_bytes       # double-buffered x + out
        cap = (vmem // 4) // per_row                     # keep <= ~1/4 of VMEM
        cap = max(8, (cap // 8) * 8)
        max_tile = min(max_tile, cap)
    except Exception:
        pass                                             # fall back to constant
    tm = pl.cdiv(M, TARGET_SPLITS)
    tm = ((tm + 7) // 8) * 8                             # sublane multiple
    tm = min(tm, max_tile)
    if tm >= M:
        return M                                         # single full block
    return tm


def pallas_forward(params, x):
    """Fused forward for the whole node graph in one pallas_call."""
    M, K = x.shape
    w1, b1 = params["fc1"]["w"], params["fc1"]["b"]
    w2, b2 = params["fc2"]["w"], params["fc2"]["b"]
    w3, b3 = params["fc3"]["w"], params["fc3"]["b"]
    d1 = w1.shape[1]          # 64
    d2 = w2.shape[1]          # 64
    n_out = w3.shape[1]       # 16

    b1r = b1.reshape(1, d1)
    b2r = b2.reshape(1, d2)
    b3r = b3.reshape(1, n_out)

    tm = _choose_tile_m(M, K, n_out)
    grid = (pl.cdiv(M, tm),)

    # Advisory cost: 3 small matmuls + bias/relu/add per row; bytes dominated
    # by streaming x in and the (M, 16) output back out.
    flops = 2 * M * (K * d1 + d1 * d2 + d2 * n_out) + M * (3 * d1 + 2 * d2 + n_out)
    bytes_accessed = 4 * (M * (K + n_out)
                          + K * d1 + d1 + d1 * d2 + d2 + d2 * n_out + n_out)

    out = pl.pallas_call(
        _fused_graph_kernel,
        out_shape=jax.ShapeDtypeStruct((M, n_out), jnp.float32),
        grid=grid,
        in_specs=[
            pl.BlockSpec((tm, K), lambda i: (i, 0)),       # x: tiled over batch
            pl.BlockSpec((K, d1), lambda i: (0, 0)),       # W1 (VMEM-resident)
            pl.BlockSpec((1, d1), lambda i: (0, 0)),       # b1
            pl.BlockSpec((d1, d2), lambda i: (0, 0)),      # W2
            pl.BlockSpec((1, d2), lambda i: (0, 0)),       # b2
            pl.BlockSpec((d2, n_out), lambda i: (0, 0)),   # W3 (true width)
            pl.BlockSpec((1, n_out), lambda i: (0, 0)),    # b3 (true width)
        ],
        out_specs=pl.BlockSpec((tm, n_out), lambda i: (i, 0)),
        compiler_params=pltpu.CompilerParams(
            dimension_semantics=("parallel",)),            # megacore sharding
        cost_estimate=pl.CostEstimate(
            flops=flops, transcendentals=0, bytes_accessed=bytes_accessed),
    )(x, w1, b1r, w2, b2r, w3, b3r)

    return out


# ----------------------------------------------------------------------------
# Graph definition + deterministic parameter init (mirrors build_graph)
# ----------------------------------------------------------------------------
CONFIG = {
    "nodes": [
        {"name": "fc1", "type": "linear", "in_features": 32, "out_features": 64,
         "activation": "relu", "input_from": "input"},
        {"name": "fc2", "type": "linear", "in_features": 64, "out_features": 64,
         "activation": "relu", "input_from": "fc1"},
        {"name": "res", "type": "add", "input_from": ["fc1", "fc2"]},
        {"name": "fc3", "type": "linear", "in_features": 64, "out_features": 16,
         "activation": None, "input_from": "res"},
    ]
}
# TODO(synk): other node types supported by get_module (conv2d, batchnorm, ...)
# are not present in this synthetic config and are not implemented here.


def init_params(config, key):
    params = {}
    for node in config["nodes"]:
        if node["type"] == "linear":
            key, kw, kb = jax.random.split(key, 3)
            fan_in = node["in_features"]
            fan_out = node["out_features"]
            scale = 1.0 / jnp.sqrt(jnp.float32(fan_in))
            w = jax.random.uniform(kw, (fan_in, fan_out), jnp.float32,
                                   minval=-scale, maxval=scale)
            b = jax.random.uniform(kb, (fan_out,), jnp.float32,
                                   minval=-scale, maxval=scale)
            params[node["name"]] = {"w": w, "b": b}
    return params


# ----------------------------------------------------------------------------
# Pure-JAX reference (cache-based graph walk, mirrors PytorchBaseModel.forward)
# ----------------------------------------------------------------------------
def forward_ref(config, params, x):
    cache = {"input": x}
    name = "input"
    for node in config["nodes"]:
        name = node["name"]
        input_from = node.get("input_from", "input")
        inputs = ([cache[k] for k in input_from]
                  if not isinstance(input_from, str) else [cache[input_from]])
        if node["type"] == "linear":
            y = inputs[0] @ params[name]["w"] + params[name]["b"]
            if node.get("activation") == "relu":
                y = jnp.maximum(y, 0.0)
        elif node["type"] == "add":
            y = inputs[0] + inputs[1]
        else:
            raise ValueError(f"unsupported node type: {node['type']}")
        cache[name] = y
    return cache[name]


if __name__ == "__main__":
    key = jax.random.PRNGKey(0)
    key, kx = jax.random.split(key)
    batch, in_features = 8, 32
    x = jax.random.normal(kx, (batch, in_features), jnp.float32)

    params = init_params(CONFIG, key)

    out = pallas_forward(params, x)
    out = jax.block_until_ready(out)

    ref = forward_ref(CONFIG, params, x)
    assert out.shape == (batch, 16), out.shape
    assert jnp.allclose(out, ref, atol=1e-4, rtol=1e-4), "mismatch vs reference"

    print("KERNEL_OK")
</pallas_src>

<mosaic_0001>
module attributes {stable_mosaic.version = 11 : i64} {
  func.func @_fused_graph_kernel(%arg0: i32, %arg1: memref<8x32xf32, #tpu.memory_space<vmem>>, %arg2: memref<32x64xf32, #tpu.memory_space<vmem>>, %arg3: memref<1x64xf32, #tpu.memory_space<vmem>>, %arg4: memref<64x64xf32, #tpu.memory_space<vmem>>, %arg5: memref<1x64xf32, #tpu.memory_space<vmem>>, %arg6: memref<64x16xf32, #tpu.memory_space<vmem>>, %arg7: memref<1x16xf32, #tpu.memory_space<vmem>>, %arg8: memref<8x16xf32, #tpu.memory_space<vmem>>) attributes {dimension_semantics = [#tpu.dimension_semantics<parallel>], iteration_bounds = array<i64: 1>, scalar_prefetch = 0 : i64, scratch_operands = 0 : i64, tpu.core_type = #tpu.core_type<tc>, window_params = [{transform_indices = @transform_0, window_bounds = array<i64: 8, 32>}, {pipeline_mode = #tpu.pipeline_mode<synchronous>, transform_indices = @transform_1, window_bounds = array<i64: 32, 64>}, {pipeline_mode = #tpu.pipeline_mode<synchronous>, transform_indices = @transform_2, window_bounds = array<i64: 1, 64>}, {pipeline_mode = #tpu.pipeline_mode<synchronous>, transform_indices = @transform_3, window_bounds = array<i64: 64, 64>}, {pipeline_mode = #tpu.pipeline_mode<synchronous>, transform_indices = @transform_4, window_bounds = array<i64: 1, 64>}, {pipeline_mode = #tpu.pipeline_mode<synchronous>, transform_indices = @transform_5, window_bounds = array<i64: 64, 16>}, {pipeline_mode = #tpu.pipeline_mode<synchronous>, transform_indices = @transform_6, window_bounds = array<i64: 1, 16>}, {transform_indices = @transform_7, window_bounds = array<i64: 8, 16>}]} {
    %c0 = arith.constant 0 : index
    %c0_0 = arith.constant 0 : index
    %0 = vector.load %arg1[%c0, %c0_0] : memref<8x32xf32, #tpu.memory_space<vmem>>, vector<8x32xf32>
    %c0_1 = arith.constant 0 : index
    %c0_2 = arith.constant 0 : index
    %1 = vector.load %arg2[%c0_1, %c0_2] : memref<32x64xf32, #tpu.memory_space<vmem>>, vector<32x64xf32>
    %cst = arith.constant dense<0.000000e+00> : vector<8x64xf32>
    %2 = tpu.matmul %0, %1, %cst {dimension_numbers = #tpu.dot_dimension_numbers<[1], [0], [0], [1], [0, 0, 1, 1], [], []>} : vector<8x32xf32>, vector<32x64xf32>, vector<8x64xf32> -> vector<8x64xf32>
    %c0_3 = arith.constant 0 : index
    %c0_4 = arith.constant 0 : index
    %3 = vector.load %arg3[%c0_3, %c0_4] : memref<1x64xf32, #tpu.memory_space<vmem>>, vector<1x64xf32>
    %4 = vector.broadcast %3 : vector<1x64xf32> to vector<8x64xf32>
    %5 = arith.addf %2, %4 : vector<8x64xf32>
    %cst_5 = arith.constant 0.000000e+00 : f32
    %6 = vector.broadcast %cst_5 : f32 to vector<8x64xf32>
    %7 = arith.maximumf %5, %6 : vector<8x64xf32>
    %c0_6 = arith.constant 0 : index
    %c0_7 = arith.constant 0 : index
    %8 = vector.load %arg4[%c0_6, %c0_7] : memref<64x64xf32, #tpu.memory_space<vmem>>, vector<64x64xf32>
    %cst_8 = arith.constant dense<0.000000e+00> : vector<8x64xf32>
    %9 = tpu.matmul %7, %8, %cst_8 {dimension_numbers = #tpu.dot_dimension_numbers<[1], [0], [0], [1], [0, 0, 1, 1], [], []>} : vector<8x64xf32>, vector<64x64xf32>, vector<8x64xf32> -> vector<8x64xf32>
    %c0_9 = arith.constant 0 : index
    %c0_10 = arith.constant 0 : index
    %10 = vector.load %arg5[%c0_9, %c0_10] : memref<1x64xf32, #tpu.memory_space<vmem>>, vector<1x64xf32>
    %11 = vector.broadcast %10 : vector<1x64xf32> to vector<8x64xf32>
    %12 = arith.addf %9, %11 : vector<8x64xf32>
    %cst_11 = arith.constant 0.000000e+00 : f32
    %13 = vector.broadcast %cst_11 : f32 to vector<8x64xf32>
    %14 = arith.maximumf %12, %13 : vector<8x64xf32>
    %15 = arith.addf %7, %14 : vector<8x64xf32>
    %c0_12 = arith.constant 0 : index
    %c0_13 = arith.constant 0 : index
    %16 = vector.load %arg6[%c0_12, %c0_13] : memref<64x16xf32, #tpu.memory_space<vmem>>, vector<64x16xf32>
    %cst_14 = arith.constant dense<0.000000e+00> : vector<8x16xf32>
    %17 = tpu.matmul %15, %16, %cst_14 {dimension_numbers = #tpu.dot_dimension_numbers<[1], [0], [0], [1], [0, 0, 1, 1], [], []>} : vector<8x64xf32>, vector<64x16xf32>, vector<8x16xf32> -> vector<8x16xf32>
    %c0_15 = arith.constant 0 : index
    %c0_16 = arith.constant 0 : index
    %18 = vector.load %arg7[%c0_15, %c0_16] : memref<1x16xf32, #tpu.memory_space<vmem>>, vector<1x16xf32>
    %19 = vector.broadcast %18 : vector<1x16xf32> to vector<8x16xf32>
    %20 = arith.addf %17, %19 : vector<8x16xf32>
    %c0_17 = arith.constant 0 : index
    %c0_18 = arith.constant 0 : index
    %21 = vector.load %arg8[%c0_17, %c0_18] : memref<8x16xf32, #tpu.memory_space<vmem>>, vector<8x16xf32>
    tpu.vector_store %arg8[%c0_17, %c0_18], %20 {strides = array<i32>} : memref<8x16xf32, #tpu.memory_space<vmem>>, vector<8x16xf32>,
    return
  }
  func.func @transform_0(%arg0: i32) -> (i32, i32) {
    %c0_i32 = arith.constant 0 : i32
    %c0_i32_0 = arith.constant 0 : i32
    return %arg0, %c0_i32 : i32, i32
  }
  func.func @transform_1(%arg0: i32) -> (i32, i32) {
    %c0_i32 = arith.constant 0 : i32
    %c0_i32_0 = arith.constant 0 : i32
    %c0_i32_1 = arith.constant 0 : i32
    return %c0_i32, %c0_i32_0 : i32, i32
  }
  func.func @transform_2(%arg0: i32) -> (i32, i32) {
    %c0_i32 = arith.constant 0 : i32
    %c0_i32_0 = arith.constant 0 : i32
    %c0_i32_1 = arith.constant 0 : i32
    return %c0_i32, %c0_i32_0 : i32, i32
  }
  func.func @transform_3(%arg0: i32) -> (i32, i32) {
    %c0_i32 = arith.constant 0 : i32
    %c0_i32_0 = arith.constant 0 : i32
    %c0_i32_1 = arith.constant 0 : i32
    return %c0_i32, %c0_i32_0 : i32, i32
  }
  func.func @transform_4(%arg0: i32) -> (i32, i32) {
    %c0_i32 = arith.constant 0 : i32
    %c0_i32_0 = arith.constant 0 : i32
    %c0_i32_1 = arith.constant 0 : i32
    return %c0_i32, %c0_i32_0 : i32, i32
  }
  func.func @transform_5(%arg0: i32) -> (i32, i32) {
    %c0_i32 = arith.constant 0 : i32
    %c0_i32_0 = arith.constant 0 : i32
    %c0_i32_1 = arith.constant 0 : i32
    return %c0_i32, %c0_i32_0 : i32, i32
  }
  func.func @transform_6(%arg0: i32) -> (i32, i32) {
    %c0_i32 = arith.constant 0 : i32
    %c0_i32_0 = arith.constant 0 : i32
    %c0_i32_1 = arith.constant 0 : i32
    return %c0_i32, %c0_i32_0 : i32, i32
  }
  func.func @transform_7(%arg0: i32) -> (i32, i32) {
    %c0_i32 = arith.constant 0 : i32
    %c0_i32_0 = arith.constant 0 : i32
    return %arg0, %c0_i32 : i32, i32
  }
}

</mosaic_0001>

<llo_original>
// kernel: tpu_custom_call.1
$region0: #{tpu_custom_call.1}
  #allocation0 [shape = 'u32[]', space=smem, size = 0x4, offset = 0x4, fixed_abs, tag = 'smem constant byte address 0x4 - core index']
  #allocation1 [shape = 'u32[72,128]{1,0:T(1,128)}', space=vmem, size = 0x9000, scoped, tag = 'internal scratch']
  %s0 = inlined_call_operand.vmem [shape: f32[8,32], index: 0, kind: input, shape index: {}]
  %s1 = inlined_call_operand.hbm [shape: f32[32,64], index: 1, kind: input, shape index: {}]
  %s2 = inlined_call_operand.vmem [shape: f32[1,64], index: 2, kind: input, shape index: {}]
  %s3 = inlined_call_operand.vmem [shape: f32[64,64], index: 3, kind: input, shape index: {}]
  %s4 = inlined_call_operand.vmem [shape: f32[1,64], index: 4, kind: input, shape index: {}]
  %s5 = inlined_call_operand.vmem [shape: f32[64,16], index: 5, kind: input, shape index: {}]
  %s6 = inlined_call_operand.vmem [shape: f32[1,16], index: 6, kind: input, shape index: {}]
  %s7 = inlined_call_operand.hbm [shape: f32[8,16], index: 7, kind: output, shape index: {}]
  %s8 = sld [smem:[#allocation0]]
  $region42: #{tpu_custom_call.1} parent=0
    _
  %s10 = ssub.s32 1, %s8
  %s11 = scalar_select 0, %s10, %s8
  $region1: #{tpu_custom_call.1} parent=0
    #allocation2 [shape = 'u8[16384]{0}', space=vmem, size = 0x4000, scoped, tag = 'input window, operand 1, single buffered']
    #allocation3 [shape = 's32[1]{0}', space=sflag, size = 0x4, scoped, tag = 'scoped memory for tpu_custom_call.1']
    #allocation4 [shape = 's32[1]{0}', space=sflag, size = 0x4, scoped, tag = 'scoped memory for tpu_custom_call.1']
    #allocation5 [shape = 'u8[4096]{0}', space=vmem, size = 0x1000, scoped, tag = 'output window, operand 0, single buffered']
    %12 = vsyncpa [#allocation3], 0
    %13 = vsyncpa [#allocation4], 0
    // Predicated region
    $region2: #{tpu_custom_call.1} parent=1 // pred_check
      _
    $region3: #{tpu_custom_call.1} parent=1 // pred_check_branch
      %15 = sbr.rel (0) target = $region5
    $region4: #{tpu_custom_call.1} parent=1 // pred_region
      _
    $region5: #{tpu_custom_call.1} parent=1 // pred_fallthru
      _
    // Predicated region
    $region6: #{tpu_custom_call.1} parent=1 // pred_check
      _
    $region7: #{tpu_custom_call.1} parent=1 // pred_check_branch
      %17 = sbr.rel (0) target = $region9
    $region8: #{tpu_custom_call.1} parent=1 // pred_region
      %19 = vsyncadd [#allocation3], 0
      %s20 = sshll.u32 %s1, 4
      %s21 = int_to_ptr.hbm [resolvable:$true] %s20
      %s22 = sshll.u32 [#allocation2], 4
      %s23 = int_to_ptr.vmem [resolvable:$true] %s22
      %28 = dma.hbm_to_vmem [thread:$0]  %s21, 512, %s23, [#allocation3], 128, 128, 8
    $region9: #{tpu_custom_call.1} parent=1 // pred_fallthru
      _
    // Predicated region
    $region10: #{tpu_custom_call.1} parent=1 // pred_check
      _
    $region11: #{tpu_custom_call.1} parent=1 // pred_check_branch
      %30 = sbr.rel (0) target = $region13
    $region12: #{tpu_custom_call.1} parent=1 // pred_region
      _
    $region13: #{tpu_custom_call.1} parent=1 // pred_fallthru
      _
    // Predicated region
    $region14: #{tpu_custom_call.1} parent=1 // pred_check
      _
    $region15: #{tpu_custom_call.1} parent=1 // pred_check_branch
      %32 = sbr.rel (0) target = $region17
    $region16: #{tpu_custom_call.1} parent=1 // pred_region
      _
    $region17: #{tpu_custom_call.1} parent=1 // pred_fallthru
      _
    // Predicated region
    $region18: #{tpu_custom_call.1} parent=1 // pred_check
      _
    $region19: #{tpu_custom_call.1} parent=1 // pred_check_branch
      %34 = sbr.rel (0) target = $region21
    $region20: #{tpu_custom_call.1} parent=1 // pred_region
      _
    $region21: #{tpu_custom_call.1} parent=1 // pred_fallthru
      _
    // Predicated region
    $region22: #{tpu_custom_call.1} parent=1 // pred_check
      _
    $region23: #{tpu_custom_call.1} parent=1 // pred_check_branch
      %36 = sbr.rel (0) target = $region25
    $region24: #{tpu_custom_call.1} parent=1 // pred_region
      _
    $region25: #{tpu_custom_call.1} parent=1 // pred_fallthru
      _
    // Predicated region
    $region26: #{tpu_custom_call.1} parent=1 // pred_check
      _
    $region27: #{tpu_custom_call.1} parent=1 // pred_check_branch
      %38 = sbr.rel (0) target = $region29
    $region28: #{tpu_custom_call.1} parent=1 // pred_region
      _
    $region29: #{tpu_custom_call.1} parent=1 // pred_fallthru
      _
    // Predicated region
    $region30: #{tpu_custom_call.1} parent=1 // pred_check
      _
    $region31: #{tpu_custom_call.1} parent=1 // pred_check_branch
      %40 = sbr.rel (0) target = $region33
    $region32: #{tpu_custom_call.1} parent=1 // pred_region
      %42 = dma.done [#allocation3], 512
    $region33: #{tpu_custom_call.1} parent=1 // pred_fallthru
      _
    %v43 = vld [vmem:[%s0] sm:$0xff]
    %v44 = vld [vmem:[#allocation2] sm:$0xff]
    %v45 = vld [vmem:[#allocation2 + $0x8] sm:$0xff]
    %v46 = vld [vmem:[#allocation2 + $0x10] sm:$0xff]
    %v47 = vld [vmem:[#allocation2 + $0x18] sm:$0xff]
    %v48 = vld [vmem:[%s2] sm:$0x1]
    %v50 = vperm.slane %v48, 0
    %vm52 = vcmask 261120
    %v54 = vsel %vm52, %v43, 0
    %56 = vmatpush.msra.mxu0 0.0
    %57 = vmatpush.msra.mxu0 0.0
    %58 = vmatpush.msra.mxu0 0.0
    %59 = vmatpush.msra.mxu0 0.0
    %60 = vmatpush.msra.mxu0 0.0
    %61 = vmatpush.msra.mxu0 0.0
    %62 = vmatpush.msra.mxu0 0.0
    %63 = vmatpush.msra.mxu0 0.0
    %64 = vmatpush.msra.mxu0 0.0
    %65 = vmatpush.msra.mxu0 0.0
    %66 = vmatpush.msra.mxu0 0.0
    %67 = vmatpush.msra.mxu0 0.0
    %68 = vmatpush.msra.mxu0 %v47
    %69 = vmatpush.msra.mxu0 %v46
    %70 = vmatpush.msra.mxu0 %v45
    %71 = vmatpush.msra.mxu0 %v44
    %72 = vmatmul.f32.gmra.mxu0 %v54
    %v73 = vpop.f32.mrf.mxu0
    %v74 = vadd.f32 %v50, %v73
    %75 = vdwg.mxu0
    %v76 = vmax.f32 %v74, 0.0
    %v77 = vld [vmem:[%s3] sm:$0xff]
    %v78 = vld [vmem:[%s3 + $0x8] sm:$0xff]
    %v79 = vld [vmem:[%s3 + $0x10] sm:$0xff]
    %v80 = vld [vmem:[%s3 + $0x18] sm:$0xff]
    %v81 = vld [vmem:[%s3 + $0x20] sm:$0xff]
    %v82 = vld [vmem:[%s3 + $0x28] sm:$0xff]
    %v83 = vld [vmem:[%s3 + $0x30] sm:$0xff]
    %v84 = vld [vmem:[%s3 + $0x38] sm:$0xff]
    %v85 = vld [vmem:[%s4] sm:$0x1]
    %v87 = vperm.slane %v85, 0
    %vm89 = vcmask 523264
    %v91 = vsel %vm89, %v76, 0
    %93 = vmatpush.msra.mxu0 0.0
    %94 = vmatpush.msra.mxu0 0.0
    %95 = vmatpush.msra.mxu0 0.0
    %96 = vmatpush.msra.mxu0 0.0
    %97 = vmatpush.msra.mxu0 0.0
    %98 = vmatpush.msra.mxu0 0.0
    %99 = vmatpush.msra.mxu0 0.0
    %100 = vmatpush.msra.mxu0 0.0
    %101 = vmatpush.msra.mxu0 %v84
    %102 = vmatpush.msra.mxu0 %v83
    %103 = vmatpush.msra.mxu0 %v82
    %104 = vmatpush.msra.mxu0 %v81
    %105 = vmatpush.msra.mxu0 %v80
    %106 = vmatpush.msra.mxu0 %v79
    %107 = vmatpush.msra.mxu0 %v78
    %108 = vmatpush.msra.mxu0 %v77
    %109 = vmatmul.f32.gmra.mxu0 %v91
    %v110 = vpop.f32.mrf.mxu0
    %v111 = vadd.f32 %v87, %v110
    %112 = vdwg.mxu0
    %v113 = vmax.f32 %v111, 0.0
    %v114 = vadd.f32 %v76, %v113
    %v115 = vld [vmem:[%s5] sm:$0xff]
    %v116 = vld [vmem:[%s5 + $0x8] sm:$0xff]
    %v117 = vld [vmem:[%s5 + $0x10] sm:$0xff]
    %v118 = vld [vmem:[%s5 + $0x18] sm:$0xff]
    %v119 = vld [vmem:[%s5 + $0x20] sm:$0xff]
    %v120 = vld [vmem:[%s5 + $0x28] sm:$0xff]
    %v121 = vld [vmem:[%s5 + $0x30] sm:$0xff]
    %v122 = vld [vmem:[%s5 + $0x38] sm:$0xff]
    %v123 = vld [vmem:[%s6] sm:$0x1]
    %v125 = vperm.slane %v123, 0
    %v128 = vsel %vm89, %v114, 0
    %130 = vmatpush.msra.mxu0 0.0
    %131 = vmatpush.msra.mxu0 0.0
    %132 = vmatpush.msra.mxu0 0.0
    %133 = vmatpush.msra.mxu0 0.0
    %134 = vmatpush.msra.mxu0 0.0
    %135 = vmatpush.msra.mxu0 0.0
    %136 = vmatpush.msra.mxu0 0.0
    %137 = vmatpush.msra.mxu0 0.0
    %138 = vmatpush.msra.mxu0 %v122
    %139 = vmatpush.msra.mxu0 %v121
    %140 = vmatpush.msra.mxu0 %v120
    %141 = vmatpush.msra.mxu0 %v119
    %142 = vmatpush.msra.mxu0 %v118
    %143 = vmatpush.msra.mxu0 %v117
    %144 = vmatpush.msra.mxu0 %v116
    %145 = vmatpush.msra.mxu0 %v115
    %146 = vmatmul.f32.gmra.mxu0 %v128
    %v147 = vpop.f32.mrf.mxu0
    %v148 = vadd.f32 %v125, %v147
    %149 = vdwg.mxu0
    %vm150 = vcmask 130048
    %151 = vst.msk [vmem:[#allocation5] sm:$0xff] %vm150, %v148
    // Predicated region
    $region34: #{tpu_custom_call.1} parent=1 // pred_check
      _
    $region35: #{tpu_custom_call.1} parent=1 // pred_check_branch
      %153 = sbr.rel (0) target = $region37
    $region36: #{tpu_custom_call.1} parent=1 // pred_region
      %155 = vsyncadd [#allocation4], 0
      %s157 = sshll.u32 [#allocation5], 4
      %s158 = int_to_ptr.vmem [resolvable:$true] %s157
      %s159 = sshll.u32 %s7, 4
      %s160 = int_to_ptr.hbm [resolvable:$true] %s159
      %162 = dma.vmem_to_hbm [thread:$0]  %s158, 128, %s160, [#allocation4]
    $region37: #{tpu_custom_call.1} parent=1 // pred_fallthru
      _
    // Predicated region
    $region38: #{tpu_custom_call.1} parent=1 // pred_check
      _
    $region39: #{tpu_custom_call.1} parent=1 // pred_check_branch
      %164 = sbr.rel (0) target = $region41
    $region40: #{tpu_custom_call.1} parent=1 // pred_region
      %166 = dma.done [#allocation4], 128
    $region41: #{tpu_custom_call.1} parent=1 // pred_fallthru
      _
    %167 = vsyncpa [#allocation3], 1
    %168 = vsyncpa [#allocation4], 1

</llo_original>
